<compile_context>
chip_gen: v7x
topology: tpu7x:2x2x1
jax: 0.10.0
libtpu: 0.0.40
codegen_flags: <defaults>
</compile_context>

<pallas_src>
import math

import jax
import jax.numpy as jnp
from jax.experimental import pallas as pl
from jax.experimental.pallas import tpu as pltpu


def make_time_pe(d_model: int, max_len: int = 52) -> jnp.ndarray:
    """Deterministic buffer setup (matches PyTorch __init__)."""
    assert d_model % 4 == 0, "d_model should be divisible by 4"
    position = jnp.arange(0, max_len, dtype=jnp.float32)[:, None]
    position = position / max_len * 2.0 * math.pi
    div_term = jnp.exp(
        jnp.arange(0, d_model, 4, dtype=jnp.float32) * (-math.log(10000.0) / d_model)
    )
    pe = jnp.zeros((max_len, d_model), jnp.float32)
    pe = pe.at[:, 0::4].set(jnp.sin(position * div_term))
    pe = pe.at[:, 1::4].set(jnp.cos(position * div_term))
    return pe


def _pe_kernel(x_ref, tpe_ref, geo_ref, o_ref):
    """o = x + time_pe + geo_pe for one (row-chunk, batch-chunk) block.

    x_ref   : (TB, TR, 128) native input dtype
    tpe_ref : (TR, 128) f32  (flattened/padded time PE; constant along batch)
    geo_ref : (TB, 1, 128) f32 per-batch geo row (broadcast over TR)
    o_ref   : (TB, TR, 128) output dtype
    """
    x = x_ref[...].astype(jnp.float32)
    o_ref[...] = (x + tpe_ref[...][None, :, :] + geo_ref[...]).astype(o_ref.dtype)
    # TODO(synk): nn.Dropout(p=0.1) is identity in eval mode; training-mode
    # dropout with the PyTorch RNG stream is not replicated here.


def positional_encoding(token_embedding, coords, time_pe, *,
                        out_dtype=None, row_cap=512, target_block_rows=2048):
    B, S, D = token_embedding.shape
    assert D % 4 == 0, "d_model should be divisible by 4"
    max_len, d_buf = time_pe.shape
    if d_buf != D:
        raise ValueError(f"time_pe d_model {d_buf} != input d_model {D}")
    if S > max_len:
        raise ValueError(f"seq_len {S} exceeds max_len {max_len} of time_pe buffer")

    if out_dtype is None:
        # Default to the input dtype for bandwidth; pass out_dtype=jnp.float32
        # to reproduce PyTorch promotion (f32 buffers) for bf16 inputs.
        out_dtype = token_embedding.dtype
    out_dtype = jnp.dtype(out_dtype)

    C = 128
    L = S * D
    L_pad = ((L + C - 1) // C) * C
    R = L_pad // C

    # --- tiny wrapper-side precompute ------------------------------------
    # Per-batch geo row: pattern depends only on (flat index % 4) == (lane % 4)
    # because D % 4 == 0 and C % 4 == 0, so one 128-lane row per batch suffices.
    lat = coords[:, 0].astype(jnp.float32) * (math.pi / 180.0)
    lon = coords[:, 1].astype(jnp.float32) * (math.pi / 180.0)
    lane_mod4 = jnp.arange(C, dtype=jnp.int32) % 4
    geo_row = (jnp.where(lane_mod4 == 2, 1.0, 0.0)[None, :] * jnp.sin(lat)[:, None]
               + jnp.where(lane_mod4 == 3, 1.0, 0.0)[None, :] * jnp.cos(lon)[:, None])
    geo_row = geo_row[:, None, :].astype(jnp.float32)              # (B, 1, 128)

    tpe_flat = time_pe[:S, :].astype(jnp.float32).reshape(L)       # (L,) f32
    x_flat = token_embedding.reshape(B, L)
    if L_pad != L:
        # Zero-pad to a lane-dense multiple of 128; output is sliced back below.
        x_flat = jnp.pad(x_flat, ((0, 0), (0, L_pad - L)))
        tpe_flat = jnp.pad(tpe_flat, (0, L_pad - L))
    x2 = x_flat.reshape(B, R, C)
    tpe2 = tpe_flat.reshape(R, C)

    # --- tile selection (cdiv grids, ragged tails handled by Pallas) ------
    if R <= row_cap:
        TR = R                      # full extent -> exempt from the 8-row rule
    else:
        TR = row_cap                # multiple of 8
    grid_r = pl.cdiv(R, TR)

    TB = max(1, min(B, target_block_rows // max(TR, 1)))
    if grid_r * pl.cdiv(B, TB) < 2 and B >= 2:
        TB = pl.cdiv(B, 2)          # ensure >=2 parallel steps for megacore/2-TC
    grid_b = pl.cdiv(B, TB)

    in_itemsize = jnp.dtype(token_embedding.dtype).itemsize
    cost = pl.CostEstimate(
        flops=2 * B * L_pad,
        transcendentals=0,
        bytes_accessed=B * L_pad * (in_itemsize + out_dtype.itemsize)
        + R * C * 4 + B * C * 4,
    )

    out2 = pl.pallas_call(
        _pe_kernel,
        out_shape=jax.ShapeDtypeStruct((B, R, C), out_dtype),
        grid_spec=pltpu.PrefetchScalarGridSpec(
            num_scalar_prefetch=0,
            grid=(grid_r, grid_b),                        # rows outer, batch inner
            in_specs=[
                pl.BlockSpec((TB, TR, C), lambda ri, bi: (bi, ri, 0)),   # x
                pl.BlockSpec((TR, C), lambda ri, bi: (ri, 0)),           # time_pe
                pl.BlockSpec((TB, 1, C), lambda ri, bi: (bi, 0, 0)),     # geo row
            ],
            out_specs=pl.BlockSpec((TB, TR, C), lambda ri, bi: (bi, ri, 0)),
        ),
        compiler_params=pltpu.CompilerParams(
            dimension_semantics=("parallel", "parallel"),
            vmem_limit_bytes=32 * 1024 * 1024,
        ),
        cost_estimate=cost,
    )(x2, tpe2, geo_row)

    out_flat = out2.reshape(B, L_pad)
    if L_pad != L:
        out_flat = out_flat[:, :L]
    return out_flat.reshape(B, S, D)


def _reference(token_embedding, coords, time_pe):
    B, S, D = token_embedding.shape
    lat = coords[:, 0] / 180.0 * math.pi
    lon = coords[:, 1] / 180.0 * math.pi
    geo = jnp.zeros((B, S, D), jnp.float32)
    geo = geo.at[:, :, 2::4].set(jnp.sin(lat)[:, None, None])
    geo = geo.at[:, :, 3::4].set(jnp.cos(lon)[:, None, None])
    return token_embedding.astype(jnp.float32) + time_pe[:S][None, :, :] + geo


if __name__ == "__main__":
    max_len = 52

    # ---- primary demo: B=2, S=8, D=32 (lane-dense, no padding needed) ----
    B, S, D = 2, 8, 32
    key = jax.random.PRNGKey(0)
    k_x, k_lat, k_lon, k_x2, k_lat2, k_lon2 = jax.random.split(key, 6)
    token_embedding = jax.random.normal(k_x, (B, S, D), dtype=jnp.float32)
    lat = jax.random.uniform(k_lat, (B, 1), minval=-90.0, maxval=90.0)
    lon = jax.random.uniform(k_lon, (B, 1), minval=-180.0, maxval=180.0)
    coords = jnp.concatenate([lat, lon], axis=1)          # [B, 2] degrees

    time_pe = make_time_pe(D, max_len)

    out = positional_encoding(token_embedding, coords, time_pe)
    out = jax.block_until_ready(out)
    ref = _reference(token_embedding, coords, time_pe)
    assert out.shape == (B, S, D) and out.dtype == jnp.float32
    assert jnp.allclose(out, ref, atol=1e-5, rtol=1e-5), "f32 mismatch vs reference"

    # bf16 path: native dtype through the kernel, bf16 out (bandwidth default)
    out_bf16 = positional_encoding(token_embedding.astype(jnp.bfloat16), coords, time_pe)
    out_bf16 = jax.block_until_ready(out_bf16)
    assert out_bf16.dtype == jnp.bfloat16
    assert jnp.allclose(out_bf16.astype(jnp.float32), ref, atol=1e-1, rtol=1e-1)

    # ---- secondary test: S*D not a multiple of 128 + ragged batch tail ----
    B2, S2, D2 = 3, 50, 20                                # L = 1000 -> padded to 1024
    time_pe2 = make_time_pe(D2, max_len)
    x2 = jax.random.normal(k_x2, (B2, S2, D2), dtype=jnp.float32)
    lat2 = jax.random.uniform(k_lat2, (B2, 1), minval=-90.0, maxval=90.0)
    lon2 = jax.random.uniform(k_lon2, (B2, 1), minval=-180.0, maxval=180.0)
    coords2 = jnp.concatenate([lat2, lon2], axis=1)
    out2 = positional_encoding(x2, coords2, time_pe2)
    out2 = jax.block_until_ready(out2)
    ref2 = _reference(x2, coords2, time_pe2)
    assert out2.shape == (B2, S2, D2)
    assert jnp.allclose(out2, ref2, atol=1e-5, rtol=1e-5), "padded-path mismatch"

    print("KERNEL_OK")
</pallas_src>

<mosaic_0001>
module attributes {stable_mosaic.version = 11 : i64} {
  func.func @_pe_kernel(%arg0: i32, %arg1: i32, %arg2: memref<1x2x128xf32, #tpu.memory_space<vmem>>, %arg3: memref<2x128xf32, #tpu.memory_space<vmem>>, %arg4: memref<1x1x128xf32, #tpu.memory_space<vmem>>, %arg5: memref<1x2x128xf32, #tpu.memory_space<vmem>>) attributes {dimension_semantics = [#tpu.dimension_semantics<parallel>, #tpu.dimension_semantics<parallel>], iteration_bounds = array<i64: 1, 2>, scalar_prefetch = 0 : i64, scratch_operands = 0 : i64, tpu.core_type = #tpu.core_type<tc>, window_params = [{transform_indices = @transform_0, window_bounds = array<i64: 1, 2, 128>}, {transform_indices = @transform_1, window_bounds = array<i64: 2, 128>}, {transform_indices = @transform_2, window_bounds = array<i64: 1, 1, 128>}, {transform_indices = @transform_3, window_bounds = array<i64: 1, 2, 128>}]} {
    %c0 = arith.constant 0 : index
    %c0_0 = arith.constant 0 : index
    %c0_1 = arith.constant 0 : index
    %0 = vector.load %arg2[%c0, %c0_0, %c0_1] : memref<1x2x128xf32, #tpu.memory_space<vmem>>, vector<1x2x128xf32>
    %c0_2 = arith.constant 0 : index
    %c0_3 = arith.constant 0 : index
    %1 = vector.load %arg3[%c0_2, %c0_3] : memref<2x128xf32, #tpu.memory_space<vmem>>, vector<2x128xf32>
    %2 = vector.shape_cast %1 : vector<2x128xf32> to vector<1x2x128xf32>
    %3 = arith.addf %0, %2 : vector<1x2x128xf32>
    %c0_4 = arith.constant 0 : index
    %c0_5 = arith.constant 0 : index
    %c0_6 = arith.constant 0 : index
    %4 = vector.load %arg4[%c0_4, %c0_5, %c0_6] : memref<1x1x128xf32, #tpu.memory_space<vmem>>, vector<1x1x128xf32>
    %5 = vector.broadcast %4 : vector<1x1x128xf32> to vector<1x2x128xf32>
    %6 = arith.addf %3, %5 : vector<1x2x128xf32>
    %c0_7 = arith.constant 0 : index
    %c0_8 = arith.constant 0 : index
    %c0_9 = arith.constant 0 : index
    %7 = vector.load %arg5[%c0_7, %c0_8, %c0_9] : memref<1x2x128xf32, #tpu.memory_space<vmem>>, vector<1x2x128xf32>
    tpu.vector_store %arg5[%c0_7, %c0_8, %c0_9], %6 {strides = array<i32>} : memref<1x2x128xf32, #tpu.memory_space<vmem>>, vector<1x2x128xf32>,
    return
  }
  func.func @transform_0(%arg0: i32, %arg1: i32) -> (i32, i32, i32) {
    %c0_i32 = arith.constant 0 : i32
    %c0_i32_0 = arith.constant 0 : i32
    return %arg1, %arg0, %c0_i32 : i32, i32, i32
  }
  func.func @transform_1(%arg0: i32, %arg1: i32) -> (i32, i32) {
    %c0_i32 = arith.constant 0 : i32
    %c0_i32_0 = arith.constant 0 : i32
    return %arg0, %c0_i32 : i32, i32
  }
  func.func @transform_2(%arg0: i32, %arg1: i32) -> (i32, i32, i32) {
    %c0_i32 = arith.constant 0 : i32
    %c0_i32_0 = arith.constant 0 : i32
    %c0_i32_1 = arith.constant 0 : i32
    return %arg1, %c0_i32, %c0_i32_0 : i32, i32, i32
  }
  func.func @transform_3(%arg0: i32, %arg1: i32) -> (i32, i32, i32) {
    %c0_i32 = arith.constant 0 : i32
    %c0_i32_0 = arith.constant 0 : i32
    return %arg1, %arg0, %c0_i32 : i32, i32, i32
  }
}

</mosaic_0001>

<llo_original>
// kernel: tpu_custom_call.1
$region0: #{tpu_custom_call.1}
  #allocation0 [shape = 'u32[]', space=smem, size = 0x4, offset = 0x4, fixed_abs, tag = 'smem constant byte address 0x4 - core index']
  #allocation1 [shape = 'u32[144,128]{1,0:T(1,128)}', space=vmem, size = 0x12000, scoped, tag = 'internal scratch']
  %s0 = inlined_call_operand.hbm [shape: f32[2,2,128], index: 0, kind: input, shape index: {}]
  %s1 = inlined_call_operand.vmem [shape: f32[2,128], index: 1, kind: input, shape index: {}]
  %s2 = inlined_call_operand.vmem [shape: f32[2,1,128], index: 2, kind: input, shape index: {}]
  %s3 = inlined_call_operand.hbm [shape: f32[2,2,128], index: 3, kind: output, shape index: {}]
  %s4 = sld [smem:[#allocation0]]
  $region49: #{tpu_custom_call.1} parent=0
    _
  %s6 = ssub.s32 1, %s4
  %s7 = scalar_select 0, %s6, %s4
  $region1: #{tpu_custom_call.1} parent=0
    #allocation2 [shape = 'u8[2048]{0}', space=vmem, size = 0x800, scoped, tag = 'input window, operand 0']
    #allocation3 [shape = 's32[2]{0}', space=sflag, size = 0x8, scoped, tag = 'scoped memory for tpu_custom_call.1']
    #allocation4 [shape = 's32[2]{0}', space=sflag, size = 0x8, scoped, tag = 'scoped memory for tpu_custom_call.1']
    #allocation5 [shape = 'u8[2048]{0}', space=vmem, size = 0x800, scoped, tag = 'output window, operand 0']
    %8 = vsyncpa [#allocation3], 0
    %s9 = scalar_lea.sflag [#allocation3], 1
    %10 = vsyncpa %s9, 0
    %11 = vsyncpa [#allocation4], 0
    %s12 = scalar_lea.sflag [#allocation4], 1
    %13 = vsyncpa %s12, 0
    loop: start=0, step=1, limit=4
    $region2: #{tpu_custom_call.1} parent=1 // loop_pre_header
      _
    $region3: #{tpu_custom_call.1} parent=1 // loop_header
      %s15 = sphi 0, %s19
      %p16 = scmp.ge.s32.totalorder %s15, 4
      %s22 = sphi 0, %s34
      %s23 = sphi 0, %s30
      %s24 = sphi 0, %s22
      %s25 = sphi 0, %s23
      %s26 = sphi 0, %s24
      %s27 = sphi 0, %s25
      %s39 = sphi 0, %s41
      %s42 = sphi 0, %s39
      %s43 = sphi 0, %s42
      %s59 = sphi 0, %s43
      %s65 = sphi 0, %s67
      %s68 = sphi 0, %s65
      %s69 = sphi 0, %s68
      %s85 = sphi 0, %s69
      %s91 = sphi 0, %s93
      %s94 = sphi 0, %s91
      %s95 = sphi 0, %s94
      %s111 = sphi 0, %s95
      %s119 = sphi 0, %s121
      %s122 = sphi 0, %s119
      %s123 = sphi 0, %s122
      %s139 = sphi 0, %s123
    $region4: #{tpu_custom_call.1} parent=1 // loop_header_branch
      %18 = sbr.rel (%p16) target = $region8
    $region5: #{tpu_custom_call.1} parent=1 // loop_body
      %s20 = ssub.s32 %s15, 1
      %s21 = ssub.s32 %s15, 2
      %s28 = sadd.s32 1, %s23
      %p29 = scmp.ge.s32.totalorder %s28, 2
      %s30 = scalar_select %p29, 0, %s28
      %s31 = sadd.s32 1, %s22
      %s32 = scalar_select %p29, %s31, %s22
      %p33 = scmp.ge.s32.totalorder %s32, 1
      %s34 = scalar_select %p33, 0, %s32
      %s35 = ssub.s32 %s23, %s30
      %s36 = ssub.s32 %s22, %s34
      %s37 = sor.u32 %s35, %s36
      %p38 = scmp.eq.s32.totalorder %s37, 0
      %s40 = sadd.s32 %s39, 1
      %s41 = scalar_select %p38, %s39, %s40
      %p44 = pneg %p38
      %p45 = scmp.eq.s32.totalorder %s15, 1
      %p46 = por %p44, %p45
      %p47 = scmp.ne.s32.totalorder %s39, %s42
      %p48 = scmp.eq.s32.totalorder %s15, 0
      %p49 = por %p47, %p48
      %p50 = scmp.ne.s32.totalorder %s39, %s42
      %p51 = scmp.eq.s32.totalorder %s20, 1
      %p52 = por %p50, %p51
      %p53 = scmp.ne.s32.totalorder %s42, %s43
      %p54 = scmp.eq.s32.totalorder %s20, 0
      %p55 = por %p53, %p54
      %p56 = scmp.ne.s32.totalorder %s42, %s43
      %p57 = scmp.eq.s32.totalorder %s21, 1
      %p58 = por %p56, %p57
      %p60 = scmp.ne.s32.totalorder %s43, %s59
      %p61 = scmp.eq.s32.totalorder %s21, 0
      %p62 = por %p60, %p61
      %s63 = ssub.s32 %s22, %s34
      %p64 = scmp.eq.s32.totalorder %s63, 0
      %s66 = sadd.s32 %s65, 1
      %s67 = scalar_select %p64, %s65, %s66
      %p70 = pneg %p64
      %p71 = scmp.eq.s32.totalorder %s15, 1
      %p72 = por %p70, %p71
      %p73 = scmp.ne.s32.totalorder %s65, %s68
      %p74 = scmp.eq.s32.totalorder %s15, 0
      %p75 = por %p73, %p74
      %p76 = scmp.ne.s32.totalorder %s65, %s68
      %p77 = scmp.eq.s32.totalorder %s20, 1
      %p78 = por %p76, %p77
      %p79 = scmp.ne.s32.totalorder %s68, %s69
      %p80 = scmp.eq.s32.totalorder %s20, 0
      %p81 = por %p79, %p80
      %p82 = scmp.ne.s32.totalorder %s68, %s69
      %p83 = scmp.eq.s32.totalorder %s21, 1
      %p84 = por %p82, %p83
      %p86 = scmp.ne.s32.totalorder %s69, %s85
      %p87 = scmp.eq.s32.totalorder %s21, 0
      %p88 = por %p86, %p87
      %s89 = ssub.s32 %s23, %s30
      %p90 = scmp.eq.s32.totalorder %s89, 0
      %s92 = sadd.s32 %s91, 1
      %s93 = scalar_select %p90, %s91, %s92
      %p96 = pneg %p90
      %p97 = scmp.eq.s32.totalorder %s15, 1
      %p98 = por %p96, %p97
      %p99 = scmp.ne.s32.totalorder %s91, %s94
      %p100 = scmp.eq.s32.totalorder %s15, 0
      %p101 = por %p99, %p100
      %p102 = scmp.ne.s32.totalorder %s91, %s94
      %p103 = scmp.eq.s32.totalorder %s20, 1
      %p104 = por %p102, %p103
      %p105 = scmp.ne.s32.totalorder %s94, %s95
      %p106 = scmp.eq.s32.totalorder %s20, 0
      %p107 = por %p105, %p106
      %p108 = scmp.ne.s32.totalorder %s94, %s95
      %p109 = scmp.eq.s32.totalorder %s21, 1
      %p110 = por %p108, %p109
      %p112 = scmp.ne.s32.totalorder %s95, %s111
      %p113 = scmp.eq.s32.totalorder %s21, 0
      %p114 = por %p112, %p113
      %s115 = ssub.s32 %s23, %s30
      %s116 = ssub.s32 %s22, %s34
      %s117 = sor.u32 %s115, %s116
      %p118 = scmp.eq.s32.totalorder %s117, 0
      %s120 = sadd.s32 %s119, 1
      %s121 = scalar_select %p118, %s119, %s120
      %p124 = pneg %p118
      %p125 = scmp.eq.s32.totalorder %s15, 1
      %p126 = por %p124, %p125
      %p127 = scmp.ne.s32.totalorder %s119, %s122
      %p128 = scmp.eq.s32.totalorder %s15, 0
      %p129 = por %p127, %p128
      %p130 = scmp.ne.s32.totalorder %s119, %s122
      %p131 = scmp.eq.s32.totalorder %s20, 1
      %p132 = por %p130, %p131
      %p133 = scmp.ne.s32.totalorder %s122, %s123
      %p134 = scmp.eq.s32.totalorder %s20, 0
      %p135 = por %p133, %p134
      %p136 = scmp.ne.s32.totalorder %s122, %s123
      %p137 = scmp.eq.s32.totalorder %s21, 1
      %p138 = por %p136, %p137
      %p140 = scmp.ne.s32.totalorder %s123, %s139
      %p141 = scmp.eq.s32.totalorder %s21, 0
      %p142 = por %p140, %p141
      %p143 = scmp.le.s32.totalorder 1, %s15
      %p144 = scmp.lt.s32.totalorder %s15, 3
      %p145 = pnand %p143, %p144
      %p146 = pneg %p145
      // Predicated region
      $region9: #{tpu_custom_call.1} parent=5 // pred_check
        _
      $region10: #{tpu_custom_call.1} parent=5 // pred_check_branch
        %148 = sbr.rel (%p145) target = $region12
      $region11: #{tpu_custom_call.1} parent=5 // pred_region
        %s149 = ssub.s32 %s15, 1
        // Predicated region
        $region13: #{tpu_custom_call.1} parent=11 // pred_check
          %p150 = pneg %p81
        $region14: #{tpu_custom_call.1} parent=11 // pred_check_branch
          %152 = sbr.rel (%p150) target = $region16
        $region15: #{tpu_custom_call.1} parent=11 // pred_region
          %p153 = scmp.lt.s32.totalorder %s24, 0
          %s154 = scalar_select %p153, %s24, 0
          %s155 = smul.addr %s154, 2
          %s156 = scalar_lea.vmem %s1, %s155
        $region16: #{tpu_custom_call.1} parent=11 // pred_fallthru
          _
      $region12: #{tpu_custom_call.1} parent=5 // pred_fallthru
        _
      %p157 = scmp.lt.s32.totalorder %s15, 2
      // Predicated region
      $region17: #{tpu_custom_call.1} parent=5 // pred_check
        %p158 = pneg %p157
      $region18: #{tpu_custom_call.1} parent=5 // pred_check_branch
        %160 = sbr.rel (%p158) target = $region20
      $region19: #{tpu_custom_call.1} parent=5 // pred_region
        // Predicated region
        $region21: #{tpu_custom_call.1} parent=19 // pred_check
          %p161 = pneg %p49
        $region22: #{tpu_custom_call.1} parent=19 // pred_check_branch
          %163 = sbr.rel (%p161) target = $region24
        $region23: #{tpu_custom_call.1} parent=19 // pred_region
          %s164 = sand.u32 %s39, 1
          %s165 = scalar_lea.sflag [#allocation3], %s164
          %s166 = sand.u32 %s39, 1
          %s167 = smul.addr %s166, 2
          %s168 = scalar_lea.vmem [#allocation2], %s167
          %s170 = ssub.s32 32, 32
          %171 = vsyncadd %s165, %s170
          %s172 = sadd.s32 %s22, %s23
          %s173 = smul.addr %s172, 32
          %s174 = scalar_lea.hbm %s0, %s173
          %s176 = sshll.u32 %s168, 4
          %s177 = int_to_ptr.vmem [resolvable:$true] %s176
          %179 = dma.hbm_to_vmem [thread:$0]  %s174, 32, %s177, %s165
        $region24: #{tpu_custom_call.1} parent=19 // pred_fallthru
          _
        // Predicated region
        $region25: #{tpu_custom_call.1} parent=19 // pred_check
          %p180 = pneg %p101
        $region26: #{tpu_custom_call.1} parent=19 // pred_check_branch
          %182 = sbr.rel (%p180) target = $region28
        $region27: #{tpu_custom_call.1} parent=19 // pred_region
          %p183 = scmp.lt.s32.totalorder %s23, 1
          %s184 = scalar_select %p183, %s23, 1
          %s185 = scalar_lea.vmem %s2, %s184
        $region28: #{tpu_custom_call.1} parent=19 // pred_fallthru
          _
      $region20: #{tpu_custom_call.1} parent=5 // pred_fallthru
        _
      %p186 = scmp.le.s32.totalorder 1, %s15
      %p187 = scmp.lt.s32.totalorder %s15, 3
      %p188 = pnand %p186, %p187
      %p189 = pneg %p188
      // Predicated region
      $region29: #{tpu_custom_call.1} parent=5 // pred_check
        _
      $region30: #{tpu_custom_call.1} parent=5 // pred_check_branch
        %191 = sbr.rel (%p188) target = $region32
      $region31: #{tpu_custom_call.1} parent=5 // pred_region
        %s192 = ssub.s32 %s15, 1
        %s193 = sand.u32 %s42, 1
        %s194 = scalar_lea.sflag [#allocation3], %s193
        %s195 = sand.u32 %s42, 1
        %s196 = smul.addr %s195, 2
        %s197 = scalar_lea.vmem [#allocation2], %s196
        // Predicated region
        $region33: #{tpu_custom_call.1} parent=31 // pred_check
          %p198 = pneg %p55
        $region34: #{tpu_custom_call.1} parent=31 // pred_check_branch
          %200 = sbr.rel (%p198) target = $region36
        $region35: #{tpu_custom_call.1} parent=31 // pred_region
          %201 = dma.done %s194, 32
        $region36: #{tpu_custom_call.1} parent=31 // pred_fallthru
          _
        %s202 = sand.u32 %s42, 1
        %s203 = scalar_lea.sflag [#allocation3], %s202
        %s204 = sand.u32 %s42, 1
        %s205 = smul.addr %s204, 2
        %s206 = scalar_lea.vmem [#allocation2], %s205
        %p207 = pneg %p55
        %p208 = pneg %p52
        %p209 = scmp.lt.s32.totalorder %s24, 0
        %s210 = scalar_select %p209, %s24, 0
        %s211 = smul.addr %s210, 2
        %s212 = scalar_lea.vmem %s1, %s211
        %p213 = pneg %p81
        %p214 = pneg %p78
        %p215 = scmp.lt.s32.totalorder %s25, 1
        %s216 = scalar_select %p215, %s25, 1
        %s217 = scalar_lea.vmem %s2, %s216
        %p218 = pneg %p107
        %p219 = pneg %p104
        %p220 = pneg %p135
        %p221 = pneg %p132
        %s222 = sand.u32 %s122, 1
        %s223 = scalar_lea.sflag [#allocation4], %s222
        %s224 = sand.u32 %s122, 1
        %s225 = smul.addr %s224, 2
        %s226 = scalar_lea.vmem [#allocation5], %s225
        %p227 = scmp.lt.s32.totalorder %s24, 0
        %s228 = scalar_select %p227, %s24, 0
        %s229 = smul.addr %s228, 2
        %s230 = scalar_lea.vmem %s1, %s229
        %p231 = scmp.lt.s32.totalorder %s25, 1
        %s232 = scalar_select %p231, %s25, 1
        %s233 = scalar_lea.vmem %s2, %s232
        %v234 = vld [vmem:[%s197] sm:$0x3]
        %v235 = vld [vmem:[%s230] sm:$0x3]
        %v236 = vadd.f32 %v234, %v235
        %v237 = vld [vmem:[%s233] sm:$0x1]
        %v239 = vlaneseq
        %v240 = vshrl.u32 %v239, 7
        %v241 = vsub.s32 0, %v240
        %v242 = vrot.slane %v237, %v241
        %v244 = vadd.f32 %v236, %v242
        %245 = vst [vmem:[%s226] sm:$0x3] %v244
        %s246 = sand.u32 %s122, 1
        %s247 = scalar_lea.sflag [#allocation4], %s246
        %s248 = sand.u32 %s122, 1
        %s249 = smul.addr %s248, 2
        %s250 = scalar_lea.vmem [#allocation5], %s249
        // Predicated region
        $region37: #{tpu_custom_call.1} parent=31 // pred_check
          %p251 = pneg %p132
        $region38: #{tpu_custom_call.1} parent=31 // pred_check_branch
          %253 = sbr.rel (%p251) target = $region40
        $region39: #{tpu_custom_call.1} parent=31 // pred_region
          %s255 = ssub.s32 32, 32
          %256 = vsyncadd %s247, %s255
          %s257 = sadd.s32 %s24, %s25
          %s258 = smul.addr %s257, 32
          %s259 = scalar_lea.hbm %s3, %s258
          %s261 = sshll.u32 %s250, 4
          %s262 = int_to_ptr.vmem [resolvable:$true] %s261
          %264 = dma.vmem_to_hbm [thread:$0]  %s262, 32, %s259, %s247
        $region40: #{tpu_custom_call.1} parent=31 // pred_fallthru
          _
      $region32: #{tpu_custom_call.1} parent=5 // pred_fallthru
        _
      %p265 = scmp.le.s32.totalorder 2, %s15
      // Predicated region
      $region41: #{tpu_custom_call.1} parent=5 // pred_check
        %p266 = pneg %p265
      $region42: #{tpu_custom_call.1} parent=5 // pred_check_branch
        %268 = sbr.rel (%p266) target = $region44
      $region43: #{tpu_custom_call.1} parent=5 // pred_region
        %s269 = ssub.s32 %s15, 2
        // Predicated region
        $region45: #{tpu_custom_call.1} parent=43 // pred_check
          %p270 = pneg %p138
        $region46: #{tpu_custom_call.1} parent=43 // pred_check_branch
          %272 = sbr.rel (%p270) target = $region48
        $region47: #{tpu_custom_call.1} parent=43 // pred_region
          %s273 = sand.u32 %s123, 1
          %s274 = scalar_lea.sflag [#allocation4], %s273
          %s275 = sand.u32 %s123, 1
          %s276 = smul.addr %s275, 2
          %s277 = scalar_lea.vmem [#allocation5], %s276
          %278 = dma.done %s274, 32
        $region48: #{tpu_custom_call.1} parent=43 // pred_fallthru
          _
      $region44: #{tpu_custom_call.1} parent=5 // pred_fallthru
        _
    $region6: #{tpu_custom_call.1} parent=1 // loop_footer
      %s19 = sadd.s32 1, %s15
    $region7: #{tpu_custom_call.1} parent=1 // loop_footer_branch
      %14 = sbr.rel target = $region3
    $region8: #{tpu_custom_call.1} parent=1 // loop_exit
      _
    %279 = vsyncpa [#allocation3], 1
    %s280 = scalar_lea.sflag [#allocation3], 1
    %281 = vsyncpa %s280, 1
    %282 = vsyncpa [#allocation4], 1
    %s283 = scalar_lea.sflag [#allocation4], 1
    %284 = vsyncpa %s283, 1

</llo_original>
